<compile_context>
chip_gen: v7x
topology: tpu7x:2x2x1
jax: 0.10.0
libtpu: 0.0.40
codegen_flags: <defaults>
</compile_context>

<pallas_src>
import jax
import jax.numpy as jnp
from jax.experimental import pallas as pl
from jax.experimental.pallas import tpu as pltpu


# ---------------------------------------------------------------------------
# Kernels
# ---------------------------------------------------------------------------

def _gcn_kernel_fused(x_ref, adj_ref, wcat_ref, b_ref, o_ref):
    """Fin != Fout branch, whole batch in one invocation.

    x_ref    : (B, N, Fin)        f32
    adj_ref  : (B, N, N)          f32
    wcat_ref : (2*Fin, Fout_pad)  f32   -- rows = [W ; W_skip], cols zero-padded
    b_ref    : (1, Fout_pad)      f32   -- zero-padded bias
    o_ref    : (B*N, Fout_pad)    f32   -- lane-dense output slab
    """
    x = x_ref[...]                                  # (B, N, Fin)
    adj = adj_ref[...]                              # (B, N, N)
    B, N, Fin = x.shape

    # Batched adj @ x on the MXU (B small -> one short matmul chain).
    ax = jnp.einsum('bij,bjf->bif', adj, x,
                    preferred_element_type=jnp.float32)      # (B, N, Fin)

    # Fuse graph-conv + skip into a single ~2*Fin-deep contraction over all
    # B*N rows:  out = [adj@x, x] @ [[W],[W_skip]]
    ax2 = ax.reshape(B * N, Fin)
    x2 = x.reshape(B * N, Fin)
    cat = jnp.concatenate([ax2, x2], axis=-1)                # (B*N, 2*Fin)

    out = jnp.dot(cat, wcat_ref[...],
                  preferred_element_type=jnp.float32)        # (B*N, Fout_pad)
    o_ref[...] = jnp.maximum(out + b_ref[...], 0.0)


def _gcn_kernel_identity(x_ref, b_ref, o_ref):
    """Fin == Fout branch: PyTorch's get_skip_connection returns X + X and the
    graph-conv output is discarded, so the result is relu(2*x + bias).
    adj / weights are intentionally NOT inputs (dead data, never DMA'd)."""
    o_ref[...] = jnp.maximum(x_ref[...] + x_ref[...] + b_ref[...], 0.0)


# ---------------------------------------------------------------------------
# Wrapper
# ---------------------------------------------------------------------------

_VMEM_SPEC = pl.BlockSpec(memory_space=pltpu.MemorySpace.VMEM)


def graph_convolution(x, adj, weight, skip_weight, bias):
    """Pallas implementation of GraphConvolution.forward.

    x           : (B, N, Fin)  float32
    adj         : (B, N, N)    float32
    weight      : (Fin, Fout)  float32
    skip_weight : (Fin, Fout)  float32 (only used when Fin != Fout)
    bias        : (Fout,)      float32
    returns     : (B, N, Fout) float32
    """
    B, N, Fin = x.shape
    Fout = weight.shape[1]

    if Fin == Fout:
        # relu(2*x + bias); adj / weight are dead inputs -> don't transfer them.
        x_flat = x.reshape(B * N, Fin)
        bias2d = bias.reshape(1, Fout)
        out_flat = pl.pallas_call(
            _gcn_kernel_identity,
            out_shape=jax.ShapeDtypeStruct((B * N, Fout), jnp.float32),
            in_specs=[_VMEM_SPEC, _VMEM_SPEC],
            out_specs=_VMEM_SPEC,
        )(x_flat, bias2d)
        return out_flat.reshape(B, N, Fout)

    # Fin != Fout: out = relu(adj @ (x @ W) + x @ W_skip + bias)
    Fout_pad = pl.cdiv(Fout, 128) * 128
    pad = Fout_pad - Fout

    w_cat = jnp.concatenate([weight, skip_weight], axis=0)      # (2*Fin, Fout)
    w_cat = jnp.pad(w_cat, ((0, 0), (0, pad)))                  # (2*Fin, Fout_pad)
    bias_p = jnp.pad(bias, (0, pad)).reshape(1, Fout_pad)       # (1, Fout_pad)

    out_flat = pl.pallas_call(
        _gcn_kernel_fused,
        out_shape=jax.ShapeDtypeStruct((B * N, Fout_pad), jnp.float32),
        in_specs=[_VMEM_SPEC, _VMEM_SPEC, _VMEM_SPEC, _VMEM_SPEC],
        out_specs=_VMEM_SPEC,
    )(x, adj, w_cat, bias_p)

    return out_flat[:, :Fout].reshape(B, N, Fout)


# ---------------------------------------------------------------------------
# Pure-JAX reference (mirrors the PyTorch module) for verification
# ---------------------------------------------------------------------------

def reference_forward(x, adj, weight, skip_weight, bias):
    support = jnp.einsum('ijk,kl->ijl', x, weight)
    out = jnp.einsum('ijk,ikl->ijl', adj, support)
    Fin, Fout = x.shape[2], weight.shape[1]
    if Fin != Fout:
        out = out + jnp.einsum('ijk,kl->ijl', x, skip_weight)
    else:
        out = x + x
    return jax.nn.relu(out + bias)


if __name__ == "__main__":
    # Shapes consistent with GCN: gc1 = GraphConvolution(58, 32), gc2 = (32, 32).
    B, N, Fin, Fout = 2, 16, 58, 32

    key = jax.random.PRNGKey(0)
    kx, kadj, kw1, ks1, kb1, kw2, kb2 = jax.random.split(key, 7)

    x = jax.random.normal(kx, (B, N, Fin), dtype=jnp.float32)
    adj = jax.random.uniform(kadj, (B, N, N), dtype=jnp.float32)

    # gc1 parameters (Fin != Fout -> linear skip branch).
    xavier_bound = (6.0 / (Fin + Fout)) ** 0.5
    weight1 = jax.random.uniform(kw1, (Fin, Fout), dtype=jnp.float32,
                                 minval=-xavier_bound, maxval=xavier_bound)
    skip_bound = 1.0 / (Fin ** 0.5)
    skip_w1 = jax.random.uniform(ks1, (Fin, Fout), dtype=jnp.float32,
                                 minval=-skip_bound, maxval=skip_bound)
    bias1 = 0.1 * jax.random.normal(kb1, (Fout,), dtype=jnp.float32)

    # gc2 parameters (Fin == Fout -> identity-skip branch).
    xavier_bound2 = (6.0 / (Fout + Fout)) ** 0.5
    weight2 = jax.random.uniform(kw2, (Fout, Fout), dtype=jnp.float32,
                                 minval=-xavier_bound2, maxval=xavier_bound2)
    skip_w2 = jnp.zeros((Fout, Fout), dtype=jnp.float32)   # unused in this branch
    bias2 = 0.1 * jax.random.normal(kb2, (Fout,), dtype=jnp.float32)

    # Layer 1: 58 -> 32 (linear skip).
    out1 = graph_convolution(x, adj, weight1, skip_w1, bias1)
    out1 = jax.block_until_ready(out1)
    ref1 = reference_forward(x, adj, weight1, skip_w1, bias1)
    assert out1.shape == (B, N, Fout)
    assert jnp.allclose(out1, ref1, atol=1e-4, rtol=1e-4), "mismatch (Fin!=Fout branch)"

    # Layer 2: 32 -> 32 (identity skip, graph-conv result discarded per PyTorch).
    out2 = graph_convolution(out1, adj, weight2, skip_w2, bias2)
    out2 = jax.block_until_ready(out2)
    ref2 = reference_forward(out1, adj, weight2, skip_w2, bias2)
    assert out2.shape == (B, N, Fout)
    assert jnp.allclose(out2, ref2, atol=1e-4, rtol=1e-4), "mismatch (Fin==Fout branch)"

    print("KERNEL_OK")
</pallas_src>

<mosaic_0001>
module attributes {stable_mosaic.version = 11 : i64} {
  func.func @_gcn_kernel_fused(%arg0: memref<2x16x58xf32, #tpu.memory_space<vmem>>, %arg1: memref<2x16x16xf32, #tpu.memory_space<vmem>>, %arg2: memref<116x128xf32, #tpu.memory_space<vmem>>, %arg3: memref<1x128xf32, #tpu.memory_space<vmem>>, %arg4: memref<32x128xf32, #tpu.memory_space<vmem>>) attributes {dimension_semantics = [], scalar_prefetch = 0 : i64, scratch_operands = 0 : i64, tpu.core_type = #tpu.core_type<tc>} {
    %c0 = arith.constant 0 : index
    %c0_0 = arith.constant 0 : index
    %c0_1 = arith.constant 0 : index
    %0 = vector.load %arg0[%c0, %c0_0, %c0_1] : memref<2x16x58xf32, #tpu.memory_space<vmem>>, vector<2x16x58xf32>
    %c0_2 = arith.constant 0 : index
    %c0_3 = arith.constant 0 : index
    %c0_4 = arith.constant 0 : index
    %1 = vector.load %arg1[%c0_2, %c0_3, %c0_4] : memref<2x16x16xf32, #tpu.memory_space<vmem>>, vector<2x16x16xf32>
    "tpu.trace_start"() <{level = 10 : i32, message = "bij,bjf->bif"}> : () -> ()
    %cst = arith.constant dense<0.000000e+00> : vector<2x16x58xf32>
    %2 = tpu.matmul %1, %0, %cst {dimension_numbers = #tpu.dot_dimension_numbers<[2], [1], [1], [2], [0, 0, 0, 1, 1, 2], [0], [0]>} : vector<2x16x16xf32>, vector<2x16x58xf32>, vector<2x16x58xf32> -> vector<2x16x58xf32>
    "tpu.trace_stop"() : () -> ()
    %3 = vector.shape_cast %2 : vector<2x16x58xf32> to vector<32x58xf32>
    %4 = vector.shape_cast %0 : vector<2x16x58xf32> to vector<32x58xf32>
    %5 = tpu.concatenate %3, %4 in 1 : vector<32x58xf32>, vector<32x58xf32> -> vector<32x116xf32>
    %c0_5 = arith.constant 0 : index
    %c0_6 = arith.constant 0 : index
    %6 = vector.load %arg2[%c0_5, %c0_6] : memref<116x128xf32, #tpu.memory_space<vmem>>, vector<116x128xf32>
    %cst_7 = arith.constant dense<0.000000e+00> : vector<32x128xf32>
    %7 = tpu.matmul %5, %6, %cst_7 {dimension_numbers = #tpu.dot_dimension_numbers<[1], [0], [0], [1], [0, 0, 1, 1], [], []>} : vector<32x116xf32>, vector<116x128xf32>, vector<32x128xf32> -> vector<32x128xf32>
    %c0_8 = arith.constant 0 : index
    %c0_9 = arith.constant 0 : index
    %8 = vector.load %arg3[%c0_8, %c0_9] : memref<1x128xf32, #tpu.memory_space<vmem>>, vector<1x128xf32>
    %9 = vector.broadcast %8 : vector<1x128xf32> to vector<32x128xf32>
    %10 = arith.addf %7, %9 : vector<32x128xf32>
    %cst_10 = arith.constant 0.000000e+00 : f32
    %11 = vector.broadcast %cst_10 : f32 to vector<32x128xf32>
    %12 = arith.maximumf %10, %11 : vector<32x128xf32>
    %c0_11 = arith.constant 0 : index
    %c0_12 = arith.constant 0 : index
    %13 = vector.load %arg4[%c0_11, %c0_12] : memref<32x128xf32, #tpu.memory_space<vmem>>, vector<32x128xf32>
    tpu.vector_store %arg4[%c0_11, %c0_12], %12 {strides = array<i32>} : memref<32x128xf32, #tpu.memory_space<vmem>>, vector<32x128xf32>,
    return
  }
}

</mosaic_0001>

<llo_original>
// kernel: tpu_custom_call.1
$region0: #{tpu_custom_call.1}
  #allocation0 [shape = 'u32[]', space=smem, size = 0x4, offset = 0x4, fixed_abs, tag = 'smem constant byte address 0x4 - core index']
  #allocation1 [shape = 'u32[144,128]{1,0:T(1,128)}', space=vmem, size = 0x12000, scoped, tag = 'internal scratch']
  %s0 = inlined_call_operand.hbm [shape: f32[2,16,58], index: 0, kind: input, shape index: {}]
  %s1 = inlined_call_operand.hbm [shape: f32[2,16,16], index: 1, kind: input, shape index: {}]
  %s2 = inlined_call_operand.hbm [shape: f32[116,128], index: 2, kind: input, shape index: {}]
  %s3 = inlined_call_operand.vmem [shape: f32[1,128], index: 3, kind: input, shape index: {}]
  %s4 = inlined_call_operand.hbm [shape: f32[32,128], index: 4, kind: output, shape index: {}]
  %s5 = sld [smem:[#allocation0]]
  $region38: #{tpu_custom_call.1} parent=0
    _
  %s7 = ssub.s32 1, %s5
  %s8 = scalar_select 0, %s7, %s5
  $region1: #{tpu_custom_call.1} parent=0
    #allocation2 [shape = 'u8[16384]{0}', space=vmem, size = 0x4000, scoped, tag = 'input window, operand 0, single buffered']
    #allocation3 [shape = 's32[1]{0}', space=sflag, size = 0x4, scoped, tag = 'scoped memory for tpu_custom_call.1']
    #allocation4 [shape = 's32[1]{0}', space=sflag, size = 0x4, scoped, tag = 'scoped memory for tpu_custom_call.1']
    #allocation5 [shape = 'u8[16384]{0}', space=vmem, size = 0x4000, scoped, tag = 'input window, operand 1, single buffered']
    #allocation6 [shape = 's32[1]{0}', space=sflag, size = 0x4, scoped, tag = 'scoped memory for tpu_custom_call.1']
    #allocation7 [shape = 'u8[61440]{0}', space=vmem, size = 0xf000, scoped, tag = 'input window, operand 2, single buffered']
    #allocation8 [shape = 'u8[16384]{0}', space=vmem, size = 0x4000, scoped, tag = 'output window, operand 0, single buffered']
    %9 = vsyncpa [#allocation3], 0
    %10 = vsyncpa [#allocation6], 0
    %11 = vsyncpa [#allocation4], 0
    // Predicated region
    $region2: #{tpu_custom_call.1} parent=1 // pred_check
      _
    $region3: #{tpu_custom_call.1} parent=1 // pred_check_branch
      %13 = sbr.rel (0) target = $region5
    $region4: #{tpu_custom_call.1} parent=1 // pred_region
      %s15 = ssub.s32 512, 512
      %16 = vsyncadd [#allocation3], %s15
      %s17 = sshll.u32 [#allocation2], 4
      %s18 = int_to_ptr.vmem [resolvable:$true] %s17
      %23 = dma.hbm_to_vmem [thread:$0]  %s0, 512, %s18, [#allocation3], 128, 128, 8
    $region5: #{tpu_custom_call.1} parent=1 // pred_fallthru
      _
    // Predicated region
    $region6: #{tpu_custom_call.1} parent=1 // pred_check
      _
    $region7: #{tpu_custom_call.1} parent=1 // pred_check_branch
      %25 = sbr.rel (0) target = $region9
    $region8: #{tpu_custom_call.1} parent=1 // pred_region
      %s27 = ssub.s32 512, 512
      %28 = vsyncadd [#allocation6], %s27
      %s29 = sshll.u32 [#allocation5], 4
      %s30 = int_to_ptr.vmem [resolvable:$true] %s29
      %35 = dma.hbm_to_vmem [thread:$0]  %s1, 512, %s30, [#allocation6], 128, 128, 8
    $region9: #{tpu_custom_call.1} parent=1 // pred_fallthru
      _
    // Predicated region
    $region10: #{tpu_custom_call.1} parent=1 // pred_check
      _
    $region11: #{tpu_custom_call.1} parent=1 // pred_check_branch
      %37 = sbr.rel (0) target = $region13
    $region12: #{tpu_custom_call.1} parent=1 // pred_region
      %s39 = ssub.s32 1920, 1920
      %40 = vsyncadd [#allocation6], %s39
      %s41 = sshll.u32 [#allocation7], 4
      %s42 = int_to_ptr.vmem [resolvable:$true] %s41
      %47 = dma.hbm_to_vmem [thread:$0]  %s2, 1920, %s42, [#allocation6], 128, 128, 8
    $region13: #{tpu_custom_call.1} parent=1 // pred_fallthru
      _
    // Predicated region
    $region14: #{tpu_custom_call.1} parent=1 // pred_check
      _
    $region15: #{tpu_custom_call.1} parent=1 // pred_check_branch
      %49 = sbr.rel (0) target = $region17
    $region16: #{tpu_custom_call.1} parent=1 // pred_region
      _
    $region17: #{tpu_custom_call.1} parent=1 // pred_fallthru
      _
    // Predicated region
    $region18: #{tpu_custom_call.1} parent=1 // pred_check
      _
    $region19: #{tpu_custom_call.1} parent=1 // pred_check_branch
      %51 = sbr.rel (0) target = $region21
    $region20: #{tpu_custom_call.1} parent=1 // pred_region
      %52 = dma.done [#allocation3], 512
    $region21: #{tpu_custom_call.1} parent=1 // pred_fallthru
      _
    // Predicated region
    $region22: #{tpu_custom_call.1} parent=1 // pred_check
      _
    $region23: #{tpu_custom_call.1} parent=1 // pred_check_branch
      %54 = sbr.rel (0) target = $region25
    $region24: #{tpu_custom_call.1} parent=1 // pred_region
      %55 = dma.done [#allocation6], 512
    $region25: #{tpu_custom_call.1} parent=1 // pred_fallthru
      _
    // Predicated region
    $region26: #{tpu_custom_call.1} parent=1 // pred_check
      _
    $region27: #{tpu_custom_call.1} parent=1 // pred_check_branch
      %57 = sbr.rel (0) target = $region29
    $region28: #{tpu_custom_call.1} parent=1 // pred_region
      %58 = dma.done [#allocation6], 1920
    $region29: #{tpu_custom_call.1} parent=1 // pred_fallthru
      _
    %v59 = vld [vmem:[#allocation2] sm:$0xff]
    %v60 = vld [vmem:[#allocation2 + $0x8] sm:$0xff]
    %v61 = vld [vmem:[#allocation2 + $0x10] sm:$0xff]
    %v62 = vld [vmem:[#allocation2 + $0x18] sm:$0xff]
    %v63 = vld [vmem:[#allocation5] sm:$0xff]
    %v64 = vld [vmem:[#allocation5 + $0x8] sm:$0xff]
    %v65 = vld [vmem:[#allocation5 + $0x10] sm:$0xff]
    %v66 = vld [vmem:[#allocation5 + $0x18] sm:$0xff]
    %vm67 = vcmask 130048
    %v69 = vsel %vm67, %v63, 0
    %v72 = vsel %vm67, %v64, 0
    %74 = vmatprep.subr.mxu0 0.0
    %75 = vmatpush1.msra.mxu0 %v59
    %76 = vmatprep.subr.mxu0 0.0
    %77 = vmatpush1.msra.mxu0 %v60
    %78 = vmatprep.subr.mxu0 0.0
    %79 = vmatpush1.msra.mxu0 0.0
    %80 = vmatprep.subr.mxu0 0.0
    %81 = vmatpush1.msra.mxu0 0.0
    %82 = vmatprep.subr.mxu0 0.0
    %83 = vmatpush1.msra.mxu0 0.0
    %84 = vmatprep.subr.mxu0 0.0
    %85 = vmatpush1.msra.mxu0 0.0
    %86 = vmatprep.subr.mxu0 0.0
    %87 = vmatpush1.msra.mxu0 0.0
    %88 = vmatprep.subr.mxu0 0.0
    %89 = vmatpush1.msra.mxu0 0.0
    %90 = vmatprep.subr.mxu0 0.0
    %91 = vmatpush1.msra.mxu0 0.0
    %92 = vmatprep.subr.mxu0 0.0
    %93 = vmatpush1.msra.mxu0 0.0
    %94 = vmatprep.subr.mxu0 0.0
    %95 = vmatpush1.msra.mxu0 0.0
    %96 = vmatprep.subr.mxu0 0.0
    %97 = vmatpush1.msra.mxu0 0.0
    %98 = vmatprep.subr.mxu0 0.0
    %99 = vmatpush1.msra.mxu0 0.0
    %100 = vmatprep.subr.mxu0 0.0
    %101 = vmatpush1.msra.mxu0 0.0
    %102 = vmatprep.subr.mxu0 0.0
    %103 = vmatpush1.msra.mxu0 0.0
    %104 = vmatprep.subr.mxu0 0.0
    %105 = vmatpush1.msra.mxu0 0.0
    %106 = vmatprep.subr.mxu0 0.0
    %107 = vmatpush1.msra.mxu0 0.0
    %108 = vmatprep.subr.mxu0 0.0
    %109 = vmatpush1.msra.mxu0 0.0
    %110 = vmatprep.subr.mxu0 0.0
    %111 = vmatpush1.msra.mxu0 0.0
    %112 = vmatprep.subr.mxu0 0.0
    %113 = vmatpush1.msra.mxu0 0.0
    %114 = vmatprep.subr.mxu0 0.0
    %115 = vmatpush1.msra.mxu0 0.0
    %116 = vmatprep.subr.mxu0 0.0
    %117 = vmatpush1.msra.mxu0 0.0
    %118 = vmatprep.subr.mxu0 0.0
    %119 = vmatpush1.msra.mxu0 0.0
    %120 = vmatprep.subr.mxu0 0.0
    %121 = vmatpush1.msra.mxu0 0.0
    %122 = vmatprep.subr.mxu0 0.0
    %123 = vmatpush1.msra.mxu0 0.0
    %124 = vmatprep.subr.mxu0 0.0
    %125 = vmatpush1.msra.mxu0 0.0
    %126 = vmatprep.subr.mxu0 0.0
    %127 = vmatpush1.msra.mxu0 0.0
    %128 = vmatprep.subr.mxu0 0.0
    %129 = vmatpush1.msra.mxu0 0.0
    %130 = vmatprep.subr.mxu0 0.0
    %131 = vmatpush1.msra.mxu0 0.0
    %132 = vmatprep.subr.mxu0 0.0
    %133 = vmatpush1.msra.mxu0 0.0
    %134 = vmatprep.subr.mxu0 0.0
    %135 = vmatpush1.msra.mxu0 0.0
    %136 = vmatprep.subr.mxu0 0.0
    %137 = vmatpush1.msra.mxu0 0.0
    %138 = vmatprep.mubr.f32.mxu0 0.0
    %139 = vmatmul.mubr.f32.gmra.mrb[0].mxu0 %v69
    %v140 = vpop.f32.mrb[0].mxu0
    %v141 = vadd.f32 0.0, %v140
    %v142 = vpop.f32.mrb[0].mxu0
    %143 = vmatprep.mubr.f32.mxu0 0.0
    %144 = vmatmul.mubr.f32.gmra.mrb[0].mxu0 %v72
    %v145 = vpop.f32.mrb[0].mxu0
    %v146 = vadd.f32 0.0, %v145
    %v147 = vpop.f32.mrb[0].mxu0
    %148 = vdwg.mxu0
    %v150 = vsel %vm67, %v65, 0
    %v153 = vsel %vm67, %v66, 0
    %155 = vmatprep.subr.mxu0 0.0
    %156 = vmatpush1.msra.mxu0 %v61
    %157 = vmatprep.subr.mxu0 0.0
    %158 = vmatpush1.msra.mxu0 %v62
    %159 = vmatprep.subr.mxu0 0.0
    %160 = vmatpush1.msra.mxu0 0.0
    %161 = vmatprep.subr.mxu0 0.0
    %162 = vmatpush1.msra.mxu0 0.0
    %163 = vmatprep.subr.mxu0 0.0
    %164 = vmatpush1.msra.mxu0 0.0
    %165 = vmatprep.subr.mxu0 0.0
    %166 = vmatpush1.msra.mxu0 0.0
    %167 = vmatprep.subr.mxu0 0.0
    %168 = vmatpush1.msra.mxu0 0.0
    %169 = vmatprep.subr.mxu0 0.0
    %170 = vmatpush1.msra.mxu0 0.0
    %171 = vmatprep.subr.mxu0 0.0
    %172 = vmatpush1.msra.mxu0 0.0
    %173 = vmatprep.subr.mxu0 0.0
    %174 = vmatpush1.msra.mxu0 0.0
    %175 = vmatprep.subr.mxu0 0.0
    %176 = vmatpush1.msra.mxu0 0.0
    %177 = vmatprep.subr.mxu0 0.0
    %178 = vmatpush1.msra.mxu0 0.0
    %179 = vmatprep.subr.mxu0 0.0
    %180 = vmatpush1.msra.mxu0 0.0
    %181 = vmatprep.subr.mxu0 0.0
    %182 = vmatpush1.msra.mxu0 0.0
    %183 = vmatprep.subr.mxu0 0.0
    %184 = vmatpush1.msra.mxu0 0.0
    %185 = vmatprep.subr.mxu0 0.0
    %186 = vmatpush1.msra.mxu0 0.0
    %187 = vmatprep.subr.mxu0 0.0
    %188 = vmatpush1.msra.mxu0 0.0
    %189 = vmatprep.subr.mxu0 0.0
    %190 = vmatpush1.msra.mxu0 0.0
    %191 = vmatprep.subr.mxu0 0.0
    %192 = vmatpush1.msra.mxu0 0.0
    %193 = vmatprep.subr.mxu0 0.0
    %194 = vmatpush1.msra.mxu0 0.0
    %195 = vmatprep.subr.mxu0 0.0
    %196 = vmatpush1.msra.mxu0 0.0
    %197 = vmatprep.subr.mxu0 0.0
    %198 = vmatpush1.msra.mxu0 0.0
    %199 = vmatprep.subr.mxu0 0.0
    %200 = vmatpush1.msra.mxu0 0.0
    %201 = vmatprep.subr.mxu0 0.0
    %202 = vmatpush1.msra.mxu0 0.0
    %203 = vmatprep.subr.mxu0 0.0
    %204 = vmatpush1.msra.mxu0 0.0
    %205 = vmatprep.subr.mxu0 0.0
    %206 = vmatpush1.msra.mxu0 0.0
    %207 = vmatprep.subr.mxu0 0.0
    %208 = vmatpush1.msra.mxu0 0.0
    %209 = vmatprep.subr.mxu0 0.0
    %210 = vmatpush1.msra.mxu0 0.0
    %211 = vmatprep.subr.mxu0 0.0
    %212 = vmatpush1.msra.mxu0 0.0
    %213 = vmatprep.subr.mxu0 0.0
    %214 = vmatpush1.msra.mxu0 0.0
    %215 = vmatprep.subr.mxu0 0.0
    %216 = vmatpush1.msra.mxu0 0.0
    %217 = vmatprep.subr.mxu0 0.0
    %218 = vmatpush1.msra.mxu0 0.0
    %219 = vmatprep.mubr.f32.mxu0 0.0
    %220 = vmatmul.mubr.f32.gmra.mrb[0].mxu0 %v150
    %v221 = vpop.f32.mrb[0].mxu0
    %v222 = vadd.f32 0.0, %v221
    %v223 = vpop.f32.mrb[0].mxu0
    %224 = vmatprep.mubr.f32.mxu0 0.0
    %225 = vmatmul.mubr.f32.gmra.mrb[0].mxu0 %v153
    %v226 = vpop.f32.mrb[0].mxu0
    %v227 = vadd.f32 0.0, %v226
    %v228 = vpop.f32.mrb[0].mxu0
    %229 = vdwg.mxu0
    %234 = vrot.lane.b32.xlu0 %v59, 58
    %v235 = vpop.permute.xlu0 %234
    %236 = vrot.lane.b32.xlu0 %v60, 58
    %v237 = vpop.permute.xlu0 %236
    %238 = vrot.lane.b32.xlu0 %v61, 58
    %v239 = vpop.permute.xlu0 %238
    %240 = vrot.lane.b32.xlu0 %v62, 58
    %v241 = vpop.permute.xlu0 %240
    %vm246 = vcmask 474112
    %v247 = vsel %vm246, %v141, %v235
    %v248 = vsel %vm246, %v146, %v237
    %v249 = vsel %vm246, %v222, %v239
    %v250 = vsel %vm246, %v227, %v241
    %v251 = vld [vmem:[#allocation7] sm:$0xff]
    %v252 = vld [vmem:[#allocation7 + $0x8] sm:$0xff]
    %v253 = vld [vmem:[#allocation7 + $0x10] sm:$0xff]
    %v254 = vld [vmem:[#allocation7 + $0x18] sm:$0xff]
    %v255 = vld [vmem:[#allocation7 + $0x20] sm:$0xff]
    %v256 = vld [vmem:[#allocation7 + $0x28] sm:$0xff]
    %v257 = vld [vmem:[#allocation7 + $0x30] sm:$0xff]
    %v258 = vld [vmem:[#allocation7 + $0x38] sm:$0xff]
    %v259 = vld [vmem:[#allocation7 + $0x40] sm:$0xff]
    %v260 = vld [vmem:[#allocation7 + $0x48] sm:$0xff]
    %v261 = vld [vmem:[#allocation7 + $0x50] sm:$0xff]
    %v262 = vld [vmem:[#allocation7 + $0x58] sm:$0xff]
    %v263 = vld [vmem:[#allocation7 + $0x60] sm:$0xff]
    %v264 = vld [vmem:[#allocation7 + $0x68] sm:$0xff]
    %v265 = vld [vmem:[#allocation7 + $0x70] sm:$0xf]
    %v266 = vld [vmem:[%s3] sm:$0x1]
    %v268 = vlaneseq
    %v269 = vshrl.u32 %v268, 7
    %v270 = vsub.s32 0, %v269
    %v271 = vrot.slane %v266, %v270
    %vm273 = vcmask 949248
    %v275 = vsel %vm273, %v247, 0
    %v278 = vsel %vm273, %v248, 0
    %v281 = vsel %vm273, %v249, 0
    %v284 = vsel %vm273, %v250, 0
    %vm286 = vcmask 1043456
    %v288 = vsel %vm286, %v265, 0
    %290 = vmatprep.subr.mxu0 0.0
    %291 = vmatpush1.msra.mxu0 %v251
    %292 = vmatprep.subr.mxu0 0.0
    %293 = vmatpush1.msra.mxu0 %v252
    %294 = vmatprep.subr.mxu0 0.0
    %295 = vmatpush1.msra.mxu0 %v253
    %296 = vmatprep.subr.mxu0 0.0
    %297 = vmatpush1.msra.mxu0 %v254
    %298 = vmatprep.subr.mxu0 0.0
    %299 = vmatpush1.msra.mxu0 %v255
    %300 = vmatprep.subr.mxu0 0.0
    %301 = vmatpush1.msra.mxu0 %v256
    %302 = vmatprep.subr.mxu0 0.0
    %303 = vmatpush1.msra.mxu0 %v257
    %304 = vmatprep.subr.mxu0 0.0
    %305 = vmatpush1.msra.mxu0 %v258
    %306 = vmatprep.subr.mxu0 0.0
    %307 = vmatpush1.msra.mxu0 %v259
    %308 = vmatprep.subr.mxu0 0.0
    %309 = vmatpush1.msra.mxu0 %v260
    %310 = vmatprep.subr.mxu0 0.0
    %311 = vmatpush1.msra.mxu0 %v261
    %312 = vmatprep.subr.mxu0 0.0
    %313 = vmatpush1.msra.mxu0 %v262
    %314 = vmatprep.subr.mxu0 0.0
    %315 = vmatpush1.msra.mxu0 %v263
    %316 = vmatprep.subr.mxu0 0.0
    %317 = vmatpush1.msra.mxu0 %v264
    %318 = vmatprep.subr.mxu0 0.0
    %319 = vmatpush1.msra.mxu0 %v288
    %320 = vmatprep.subr.mxu0 0.0
    %321 = vmatpush1.msra.mxu0 0.0
    %322 = vmatprep.subr.mxu0 0.0
    %323 = vmatpush1.msra.mxu0 0.0
    %324 = vmatprep.subr.mxu0 0.0
    %325 = vmatpush1.msra.mxu0 0.0
    %326 = vmatprep.subr.mxu0 0.0
    %327 = vmatpush1.msra.mxu0 0.0
    %328 = vmatprep.subr.mxu0 0.0
    %329 = vmatpush1.msra.mxu0 0.0
    %330 = vmatprep.subr.mxu0 0.0
    %331 = vmatpush1.msra.mxu0 0.0
    %332 = vmatprep.subr.mxu0 0.0
    %333 = vmatpush1.msra.mxu0 0.0
    %334 = vmatprep.subr.mxu0 0.0
    %335 = vmatpush1.msra.mxu0 0.0
    %336 = vmatprep.subr.mxu0 0.0
    %337 = vmatpush1.msra.mxu0 0.0
    %338 = vmatprep.subr.mxu0 0.0
    %339 = vmatpush1.msra.mxu0 0.0
    %340 = vmatprep.subr.mxu0 0.0
    %341 = vmatpush1.msra.mxu0 0.0
    %342 = vmatprep.subr.mxu0 0.0
    %343 = vmatpush1.msra.mxu0 0.0
    %344 = vmatprep.subr.mxu0 0.0
    %345 = vmatpush1.msra.mxu0 0.0
    %346 = vmatprep.subr.mxu0 0.0
    %347 = vmatpush1.msra.mxu0 0.0
    %348 = vmatprep.subr.mxu0 0.0
    %349 = vmatpush1.msra.mxu0 0.0
    %350 = vmatprep.subr.mxu0 0.0
    %351 = vmatpush1.msra.mxu0 0.0
    %352 = vmatprep.subr.mxu0 0.0
    %353 = vmatpush1.msra.mxu0 0.0
    %354 = vmatprep.mubr.f32.mxu0 0.0
    %355 = vmatmul.mubr.f32.gmra.mrb[0].mxu0 %v275
    %v356 = vpop.f32.mrb[0].mxu0
    %v357 = vadd.f32 %v271, %v356
    %v358 = vpop.f32.mrb[0].mxu0
    %359 = vmatprep.mubr.f32.mxu0 0.0
    %360 = vmatmul.mubr.f32.gmra.mrb[0].mxu0 %v278
    %v361 = vpop.f32.mrb[0].mxu0
    %v362 = vadd.f32 %v271, %v361
    %v363 = vpop.f32.mrb[0].mxu0
    %364 = vmatprep.mubr.f32.mxu0 0.0
    %365 = vmatmul.mubr.f32.gmra.mrb[0].mxu0 %v281
    %v366 = vpop.f32.mrb[0].mxu0
    %v367 = vadd.f32 %v271, %v366
    %v368 = vpop.f32.mrb[0].mxu0
    %369 = vmatprep.mubr.f32.mxu0 0.0
    %370 = vmatmul.mubr.f32.gmra.mrb[0].mxu0 %v284
    %v371 = vpop.f32.mrb[0].mxu0
    %v372 = vadd.f32 %v271, %v371
    %v373 = vpop.f32.mrb[0].mxu0
    %374 = vdwg.mxu0
    %v375 = vmax.f32 %v357, 0.0
    %v376 = vmax.f32 %v362, 0.0
    %v377 = vmax.f32 %v367, 0.0
    %v378 = vmax.f32 %v372, 0.0
    %379 = vst [vmem:[#allocation8] sm:$0xff] %v375
    %380 = vst [vmem:[#allocation8 + $0x8] sm:$0xff] %v376
    %381 = vst [vmem:[#allocation8 + $0x10] sm:$0xff] %v377
    %382 = vst [vmem:[#allocation8 + $0x18] sm:$0xff] %v378
    // Predicated region
    $region30: #{tpu_custom_call.1} parent=1 // pred_check
      _
    $region31: #{tpu_custom_call.1} parent=1 // pred_check_branch
      %384 = sbr.rel (0) target = $region33
    $region32: #{tpu_custom_call.1} parent=1 // pred_region
      %s386 = ssub.s32 512, 512
      %387 = vsyncadd [#allocation4], %s386
      %s388 = sshll.u32 [#allocation8], 4
      %s389 = int_to_ptr.vmem [resolvable:$true] %s388
      %394 = dma.vmem_to_hbm [thread:$0]  %s389, 512, %s4, [#allocation4], 128, 128, 8
    $region33: #{tpu_custom_call.1} parent=1 // pred_fallthru
      _
    // Predicated region
    $region34: #{tpu_custom_call.1} parent=1 // pred_check
      _
    $region35: #{tpu_custom_call.1} parent=1 // pred_check_branch
      %396 = sbr.rel (0) target = $region37
    $region36: #{tpu_custom_call.1} parent=1 // pred_region
      %397 = dma.done [#allocation4], 512
    $region37: #{tpu_custom_call.1} parent=1 // pred_fallthru
      _
    %398 = vsyncpa [#allocation3], 1
    %399 = vsyncpa [#allocation6], 1
    %400 = vsyncpa [#allocation4], 1

</llo_original>
